<compile_context>
chip_gen: v5e
topology: v5e:2x2
jax: 0.10.0
libtpu: 0.0.40
codegen_flags: <defaults>
</compile_context>

<pallas_src>
import numpy as np
import jax
import jax.numpy as jnp
from jax.experimental import pallas as pl
from jax.experimental.pallas import tpu as pltpu

C1, C2, K = 64, 32, 3  # conv1 out-ch, conv2 out-ch, kernel size


def cnn_series_kernel(xT_ref, w1t_ref, b1_ref, a2_ref, b2_ref, wf_ref, bf_ref,
                      out_ref):
    """One batch tile.  All activations are (features, B_TILE): batch on lanes."""
    L0, Bt = xT_ref.shape
    L1 = L0 - (K - 1)          # length after conv1
    L1p = L1 // 2              # after maxpool1
    L2 = a2_ref.shape[0] // C2  # length after conv2
    L2p = L2 // 2              # after maxpool2

    x = xT_ref[...]            # (L0, Bt)  f32
    w1t = w1t_ref[...]         # (K, C1, 1) f32

    # ---- conv1 on the VPU: K=3 shifted broadcast-FMAs, bias folded in ------
    #   h1[l, c, b] = b1[c] + sum_k w1[c, k] * x[l + k, b]
    h1 = b1_ref[...][None, :, :] + x[0:L1, :][:, None, :] * w1t[0][None, :, :]
    for k in range(1, K):
        h1 = h1 + x[k:k + L1, :][:, None, :] * w1t[k][None, :, :]
    # ReLU + MaxPool1d(2); relu(max(a, b)) == max(relu(a), relu(b))
    h1 = h1.reshape(L1p, 2, C1, Bt)
    h1p = jnp.maximum(jnp.maximum(h1[:, 0], h1[:, 1]), 0.0)        # (L1p,C1,Bt)
    h1p = h1p.reshape(L1p * C1, Bt)                                # (384, Bt)

    # ---- conv2: ONE banded MXU matmul, bf16 operands, f32 accumulate -------
    h2 = jnp.dot(a2_ref[...], h1p.astype(a2_ref.dtype),
                 preferred_element_type=jnp.float32)               # (L2*C2, Bt)
    h2 = h2.reshape(L2p, 2, C2, Bt) + b2_ref[...][None, None, :, :]
    h2p = jnp.maximum(jnp.maximum(h2[:, 0], h2[:, 1]), 0.0)
    h2p = h2p.reshape(L2p * C2, Bt)                                # (64, Bt)

    # ---- fc: (1, 64) @ (64, Bt) exact f32 -> lane-dense (1, Bt) output -----
    out_ref[...] = (jnp.dot(wf_ref[...], h2p,
                            preferred_element_type=jnp.float32) + bf_ref[...])


def _round_up(n, m):
    return ((n + m - 1) // m) * m


def _choose_batch_tile(batch, b_tile_max=1024):
    """Lane tile for the batch: multiple of 128, minimal padding waste,
    >= 2 grid steps whenever the batch allows it (keeps both v7x TensorCores
    busy), capped at b_tile_max so the per-tile working set stays inside every
    generation's scoped VMEM."""
    b_tile_max = max(128, (b_tile_max // 128) * 128)
    bp_min = _round_up(batch, 128)
    if bp_min <= 128:
        return 128, 128
    cap = min(b_tile_max, max(128, (bp_min // 2 // 128) * 128))
    best_bt, best_bp = 128, bp_min
    for bt in range(128, cap + 1, 128):
        bp = _round_up(batch, bt)
        if bp < best_bp or (bp == best_bp and bt > best_bt):
            best_bt, best_bp = bt, bp
    return best_bt, best_bp


def cnn_series_forward(x_ncl, params, *, b_tile_max=1024,
                       matmul_dtype=jnp.bfloat16):
    """x_ncl: (B, 1, L) float32 in PyTorch NCL layout. params in PyTorch layout.
    Pass matmul_dtype=jnp.float32 for an exact-parity validation mode."""
    w1, b1, w2, b2, wf, bf = params
    B, c_in, L0 = x_ncl.shape
    assert c_in == 1
    L1 = L0 - (K - 1)
    L1p = L1 // 2
    L2 = L1p - (K - 1)
    L2p = L2 // 2
    assert L1 % 2 == 0 and L2 % 2 == 0
    assert L2p * C2 == wf.shape[1], "input length inconsistent with Linear(64, 1)"

    # ---- batch tiling: lane-dense multiple-of-128 tiles, minimal padding ----
    bt, Bp = _choose_batch_tile(B, b_tile_max)
    assert bt % 128 == 0 and Bp % bt == 0
    grid = (Bp // bt,)

    # ---- layout plumbing (plain JAX): batch -> lanes ------------------------
    x2d = x_ncl[:, 0, :].astype(jnp.float32)                   # (B, L0)
    xT = jnp.pad(x2d, ((0, Bp - B), (0, 0))).T                 # (L0, Bp) f32

    # conv1 taps for the in-kernel VPU path: w1t[k, c, 0] = w1[c, 0, k]
    w1t = jnp.transpose(w1[:, 0, :], (1, 0))[:, :, None].astype(jnp.float32)
    b1c = b1.reshape(C1, 1).astype(jnp.float32)

    # conv2 folded into one banded matrix (MXU operand in matmul_dtype):
    #   A2[l*C2 + co, m*C1 + ci] = w2[co, ci, m - l]  for 0 <= m - l < K
    # Built from a static numpy band indicator + a single einsum (jit-friendly,
    # no dynamic-update-slice chains).
    sel = np.zeros((L2, K, L1p), np.float32)
    for l in range(L2):
        for k in range(K):
            sel[l, k, l + k] = 1.0
    A2 = jnp.einsum("oik,lkm->lomi", w2.astype(jnp.float32), jnp.asarray(sel))
    A2 = A2.reshape(L2 * C2, L1p * C1).astype(matmul_dtype)
    b2c = b2.reshape(C2, 1).astype(jnp.float32)

    # fc weight remapped to the kernel's (position, channel) row order:
    #   wfr[0, p*C2 + c] = wf[0, c*L2p + p]   (PyTorch flatten is channel-major)
    wfr = wf.reshape(C2, L2p).T.reshape(1, L2p * C2).astype(jnp.float32)
    bfr = bf.reshape(1, 1).astype(jnp.float32)

    def _const(arr):  # grid-invariant weight, whole array resident every step
        nd = arr.ndim
        return pl.BlockSpec(arr.shape, lambda i, _nd=nd: (0,) * _nd)
        # TODO(synk): pipeline_mode=pl.Buffered(1) would single-buffer these
        # constants (small VMEM saving on v7x); kept on the validated path.

    flops = 2 * Bp * (L1 * C1 * K + (L2 * C2) * (L1p * C1) + L2p * C2)
    bytes_accessed = 4 * Bp * (L0 + 1) + 2 * int(A2.size) + 4 * (
        K * C1 + C1 + C2 + L2p * C2 + 1)

    out_row = pl.pallas_call(
        cnn_series_kernel,
        out_shape=jax.ShapeDtypeStruct((1, Bp), jnp.float32),
        grid=grid,
        in_specs=[pl.BlockSpec((L0, bt), lambda i: (0, i)),     # x: batch-tiled
                  _const(w1t), _const(b1c), _const(A2), _const(b2c),
                  _const(wfr), _const(bfr)],
        out_specs=pl.BlockSpec((1, bt), lambda i: (0, i)),      # lane-dense out
        compiler_params=pltpu.CompilerParams(
            dimension_semantics=("parallel",),                  # megacore v7x
            vmem_limit_bytes=32 * 1024 * 1024),                 # v5e headroom
        cost_estimate=pl.CostEstimate(flops=int(flops), transcendentals=0,
                                      bytes_accessed=int(bytes_accessed)),
    )(xT, w1t, b1c, A2, b2c, wfr, bfr)

    return out_row[0, :B].reshape(B, 1)


# ---------------- pure-JAX reference (PyTorch semantics, NCL) ----------------
def ref_forward(x, w1, b1, w2, b2, wf, bf):
    def conv1d(x, w, b):
        B, Cin, L = x.shape
        Cout, _, Kk = w.shape
        Lout = L - Kk + 1
        patches = jnp.stack([x[:, :, k:k + Lout] for k in range(Kk)], axis=2)
        return jnp.einsum("oik,bikl->bol", w, patches) + b[None, :, None]

    def pool(x):
        B, C, L = x.shape
        return x.reshape(B, C, L // 2, 2).max(axis=3)

    h = pool(jax.nn.relu(conv1d(x, w1, b1)))
    h = pool(jax.nn.relu(conv1d(h, w2, b2)))
    flat = h.reshape(h.shape[0], -1)           # channel-major flatten (like x.view)
    return flat @ wf.T + bf[None, :]


def init_params(key):
    ks = jax.random.split(key, 6)

    def u(k, shape, fan_in):
        bound = 1.0 / jnp.sqrt(jnp.float32(fan_in))
        return jax.random.uniform(k, shape, jnp.float32, -bound, bound)

    w1 = u(ks[0], (C1, 1, K), 1 * K)     # Conv1d(1, 64, 3).weight
    b1 = u(ks[1], (C1,), 1 * K)
    w2 = u(ks[2], (C2, C1, K), C1 * K)   # Conv1d(64, 32, 3).weight
    b2 = u(ks[3], (C2,), C1 * K)
    wf = u(ks[4], (1, 64), 64)           # Linear(64, 1).weight
    bf = u(ks[5], (1,), 64)
    return (w1, b1, w2, b2, wf, bf)


if __name__ == "__main__":
    key = jax.random.PRNGKey(0)
    pkey, xkey = jax.random.split(key)
    params = init_params(pkey)

    # input: (batch=2, in_channels=1, length=14) -> flatten after conv2 is 64
    x = jax.random.normal(xkey, (2, 1, 14), jnp.float32)

    fwd = jax.jit(cnn_series_forward)
    out = jax.block_until_ready(fwd(x, params))
    ref = jax.block_until_ready(ref_forward(x, *params))

    assert out.shape == (2, 1), out.shape
    # conv2 runs with bf16 MXU operands (f32 accumulate), so tolerance is
    # loosened vs. the all-f32 reference per the perf review.
    assert jnp.allclose(out, ref, atol=2e-2, rtol=2e-2), (out, ref)
    print("KERNEL_OK")
</pallas_src>

<mosaic_0001>
module attributes {stable_mosaic.version = 11 : i64} {
  func.func @cnn_series_kernel(%arg0: i32, %arg1: memref<14x128xf32, #tpu.memory_space<vmem>>, %arg2: memref<3x64x1xf32, #tpu.memory_space<vmem>>, %arg3: memref<64x1xf32, #tpu.memory_space<vmem>>, %arg4: memref<128x384xbf16, #tpu.memory_space<vmem>>, %arg5: memref<32x1xf32, #tpu.memory_space<vmem>>, %arg6: memref<1x64xf32, #tpu.memory_space<vmem>>, %arg7: memref<1x1xf32, #tpu.memory_space<vmem>>, %arg8: memref<1x128xf32, #tpu.memory_space<vmem>>) attributes {dimension_semantics = [#tpu.dimension_semantics<parallel>], iteration_bounds = array<i64: 1>, scalar_prefetch = 0 : i64, scratch_operands = 0 : i64, tpu.core_type = #tpu.core_type<tc>, window_params = [{transform_indices = @transform_0, window_bounds = array<i64: 14, 128>}, {pipeline_mode = #tpu.pipeline_mode<synchronous>, transform_indices = @transform_1, window_bounds = array<i64: 3, 64, 1>}, {pipeline_mode = #tpu.pipeline_mode<synchronous>, transform_indices = @transform_2, window_bounds = array<i64: 64, 1>}, {pipeline_mode = #tpu.pipeline_mode<synchronous>, transform_indices = @transform_3, window_bounds = array<i64: 128, 384>}, {pipeline_mode = #tpu.pipeline_mode<synchronous>, transform_indices = @transform_4, window_bounds = array<i64: 32, 1>}, {pipeline_mode = #tpu.pipeline_mode<synchronous>, transform_indices = @transform_5, window_bounds = array<i64: 1, 64>}, {pipeline_mode = #tpu.pipeline_mode<synchronous>, transform_indices = @transform_6, window_bounds = array<i64: 1, 1>}, {transform_indices = @transform_7, window_bounds = array<i64: 1, 128>}]} {
    %c0 = arith.constant 0 : index
    %c0_0 = arith.constant 0 : index
    %0 = vector.load %arg1[%c0, %c0_0] : memref<14x128xf32, #tpu.memory_space<vmem>>, vector<14x128xf32>
    %c0_1 = arith.constant 0 : index
    %c0_2 = arith.constant 0 : index
    %c0_3 = arith.constant 0 : index
    %1 = vector.load %arg2[%c0_1, %c0_2, %c0_3] : memref<3x64x1xf32, #tpu.memory_space<vmem>>, vector<3x64x1xf32>
    %c0_4 = arith.constant 0 : index
    %c0_5 = arith.constant 0 : index
    %2 = vector.load %arg3[%c0_4, %c0_5] : memref<64x1xf32, #tpu.memory_space<vmem>>, vector<64x1xf32>
    %3 = vector.shape_cast %2 : vector<64x1xf32> to vector<1x64x1xf32>
    %4 = vector.extract_strided_slice %0 {offsets = [0, 0], sizes = [12, 128], strides = [1, 1]} : vector<14x128xf32> to vector<12x128xf32>
    %5 = vector.shape_cast %4 : vector<12x128xf32> to vector<12x1x128xf32>
    %6 = vector.extract_strided_slice %1 {offsets = [0, 0, 0], sizes = [1, 64, 1], strides = [1, 1, 1]} : vector<3x64x1xf32> to vector<1x64x1xf32>
    %7 = vector.shape_cast %6 : vector<1x64x1xf32> to vector<64x1xf32>
    %8 = vector.shape_cast %7 : vector<64x1xf32> to vector<1x64x1xf32>
    %9 = vector.broadcast %5 : vector<12x1x128xf32> to vector<12x64x128xf32>
    %10 = vector.broadcast %8 : vector<1x64x1xf32> to vector<12x64x128xf32>
    %11 = arith.mulf %9, %10 : vector<12x64x128xf32>
    %12 = vector.broadcast %3 : vector<1x64x1xf32> to vector<12x64x128xf32>
    %13 = arith.addf %12, %11 : vector<12x64x128xf32>
    %14 = vector.extract_strided_slice %0 {offsets = [1, 0], sizes = [12, 128], strides = [1, 1]} : vector<14x128xf32> to vector<12x128xf32>
    %15 = vector.shape_cast %14 : vector<12x128xf32> to vector<12x1x128xf32>
    %16 = vector.extract_strided_slice %1 {offsets = [1, 0, 0], sizes = [1, 64, 1], strides = [1, 1, 1]} : vector<3x64x1xf32> to vector<1x64x1xf32>
    %17 = vector.shape_cast %16 : vector<1x64x1xf32> to vector<64x1xf32>
    %18 = vector.shape_cast %17 : vector<64x1xf32> to vector<1x64x1xf32>
    %19 = vector.broadcast %15 : vector<12x1x128xf32> to vector<12x64x128xf32>
    %20 = vector.broadcast %18 : vector<1x64x1xf32> to vector<12x64x128xf32>
    %21 = arith.mulf %19, %20 : vector<12x64x128xf32>
    %22 = arith.addf %13, %21 : vector<12x64x128xf32>
    %23 = vector.extract_strided_slice %0 {offsets = [2, 0], sizes = [12, 128], strides = [1, 1]} : vector<14x128xf32> to vector<12x128xf32>
    %24 = vector.shape_cast %23 : vector<12x128xf32> to vector<12x1x128xf32>
    %25 = vector.extract_strided_slice %1 {offsets = [2, 0, 0], sizes = [1, 64, 1], strides = [1, 1, 1]} : vector<3x64x1xf32> to vector<1x64x1xf32>
    %26 = vector.shape_cast %25 : vector<1x64x1xf32> to vector<64x1xf32>
    %27 = vector.shape_cast %26 : vector<64x1xf32> to vector<1x64x1xf32>
    %28 = vector.broadcast %24 : vector<12x1x128xf32> to vector<12x64x128xf32>
    %29 = vector.broadcast %27 : vector<1x64x1xf32> to vector<12x64x128xf32>
    %30 = arith.mulf %28, %29 : vector<12x64x128xf32>
    %31 = arith.addf %22, %30 : vector<12x64x128xf32>
    %32 = vector.shape_cast %31 : vector<12x64x128xf32> to vector<6x2x64x128xf32>
    %33 = vector.extract_strided_slice %32 {offsets = [0, 0, 0, 0], sizes = [6, 1, 64, 128], strides = [1, 1, 1, 1]} : vector<6x2x64x128xf32> to vector<6x1x64x128xf32>
    %34 = vector.shape_cast %33 : vector<6x1x64x128xf32> to vector<6x64x128xf32>
    %35 = vector.extract_strided_slice %32 {offsets = [0, 1, 0, 0], sizes = [6, 1, 64, 128], strides = [1, 1, 1, 1]} : vector<6x2x64x128xf32> to vector<6x1x64x128xf32>
    %36 = vector.shape_cast %35 : vector<6x1x64x128xf32> to vector<6x64x128xf32>
    %37 = arith.maximumf %34, %36 : vector<6x64x128xf32>
    %cst = arith.constant 0.000000e+00 : f32
    %38 = vector.broadcast %cst : f32 to vector<6x64x128xf32>
    %39 = arith.maximumf %37, %38 : vector<6x64x128xf32>
    %40 = vector.shape_cast %39 : vector<6x64x128xf32> to vector<384x128xf32>
    %c0_6 = arith.constant 0 : index
    %c0_7 = arith.constant 0 : index
    %41 = vector.load %arg4[%c0_6, %c0_7] : memref<128x384xbf16, #tpu.memory_space<vmem>>, vector<128x384xbf16>
    %42 = arith.truncf %40 : vector<384x128xf32> to vector<384x128xbf16>
    %cst_8 = arith.constant dense<0.000000e+00> : vector<128x128xf32>
    %43 = tpu.matmul %41, %42, %cst_8 {dimension_numbers = #tpu.dot_dimension_numbers<[1], [0], [0], [1], [0, 0, 1, 1], [], []>} : vector<128x384xbf16>, vector<384x128xbf16>, vector<128x128xf32> -> vector<128x128xf32>
    %44 = vector.shape_cast %43 : vector<128x128xf32> to vector<2x2x32x128xf32>
    %c0_9 = arith.constant 0 : index
    %c0_10 = arith.constant 0 : index
    %45 = vector.load %arg5[%c0_9, %c0_10] : memref<32x1xf32, #tpu.memory_space<vmem>>, vector<32x1xf32>
    %46 = vector.shape_cast %45 : vector<32x1xf32> to vector<1x1x32x1xf32>
    %47 = vector.broadcast %46 : vector<1x1x32x1xf32> to vector<2x2x32x128xf32>
    %48 = arith.addf %44, %47 : vector<2x2x32x128xf32>
    %49 = vector.extract_strided_slice %48 {offsets = [0, 0, 0, 0], sizes = [2, 1, 32, 128], strides = [1, 1, 1, 1]} : vector<2x2x32x128xf32> to vector<2x1x32x128xf32>
    %50 = vector.shape_cast %49 : vector<2x1x32x128xf32> to vector<2x32x128xf32>
    %51 = vector.extract_strided_slice %48 {offsets = [0, 1, 0, 0], sizes = [2, 1, 32, 128], strides = [1, 1, 1, 1]} : vector<2x2x32x128xf32> to vector<2x1x32x128xf32>
    %52 = vector.shape_cast %51 : vector<2x1x32x128xf32> to vector<2x32x128xf32>
    %53 = arith.maximumf %50, %52 : vector<2x32x128xf32>
    %cst_11 = arith.constant 0.000000e+00 : f32
    %54 = vector.broadcast %cst_11 : f32 to vector<2x32x128xf32>
    %55 = arith.maximumf %53, %54 : vector<2x32x128xf32>
    %56 = vector.shape_cast %55 : vector<2x32x128xf32> to vector<64x128xf32>
    %c0_12 = arith.constant 0 : index
    %c0_13 = arith.constant 0 : index
    %57 = vector.load %arg6[%c0_12, %c0_13] : memref<1x64xf32, #tpu.memory_space<vmem>>, vector<1x64xf32>
    %cst_14 = arith.constant dense<0.000000e+00> : vector<1x128xf32>
    %58 = tpu.matmul %57, %56, %cst_14 {dimension_numbers = #tpu.dot_dimension_numbers<[1], [0], [0], [1], [0, 0, 1, 1], [], []>} : vector<1x64xf32>, vector<64x128xf32>, vector<1x128xf32> -> vector<1x128xf32>
    %c0_15 = arith.constant 0 : index
    %c0_16 = arith.constant 0 : index
    %59 = vector.load %arg7[%c0_15, %c0_16] : memref<1x1xf32, #tpu.memory_space<vmem>>, vector<1x1xf32>
    %60 = vector.broadcast %59 : vector<1x1xf32> to vector<1x128xf32>
    %61 = arith.addf %58, %60 : vector<1x128xf32>
    %c0_17 = arith.constant 0 : index
    %c0_18 = arith.constant 0 : index
    %62 = vector.load %arg8[%c0_17, %c0_18] : memref<1x128xf32, #tpu.memory_space<vmem>>, vector<1x128xf32>
    tpu.vector_store %arg8[%c0_17, %c0_18], %61 {strides = array<i32>} : memref<1x128xf32, #tpu.memory_space<vmem>>, vector<1x128xf32>,
    return
  }
  func.func @transform_0(%arg0: i32) -> (i32, i32) {
    %c0_i32 = arith.constant 0 : i32
    %c0_i32_0 = arith.constant 0 : i32
    return %c0_i32, %arg0 : i32, i32
  }
  func.func @transform_1(%arg0: i32) -> (i32, i32, i32) {
    %c0_i32 = arith.constant 0 : i32
    %c0_i32_0 = arith.constant 0 : i32
    %c0_i32_1 = arith.constant 0 : i32
    %c0_i32_2 = arith.constant 0 : i32
    return %c0_i32, %c0_i32_0, %c0_i32_1 : i32, i32, i32
  }
  func.func @transform_2(%arg0: i32) -> (i32, i32) {
    %c0_i32 = arith.constant 0 : i32
    %c0_i32_0 = arith.constant 0 : i32
    %c0_i32_1 = arith.constant 0 : i32
    return %c0_i32, %c0_i32_0 : i32, i32
  }
  func.func @transform_3(%arg0: i32) -> (i32, i32) {
    %c0_i32 = arith.constant 0 : i32
    %c0_i32_0 = arith.constant 0 : i32
    %c0_i32_1 = arith.constant 0 : i32
    return %c0_i32, %c0_i32_0 : i32, i32
  }
  func.func @transform_4(%arg0: i32) -> (i32, i32) {
    %c0_i32 = arith.constant 0 : i32
    %c0_i32_0 = arith.constant 0 : i32
    %c0_i32_1 = arith.constant 0 : i32
    return %c0_i32, %c0_i32_0 : i32, i32
  }
  func.func @transform_5(%arg0: i32) -> (i32, i32) {
    %c0_i32 = arith.constant 0 : i32
    %c0_i32_0 = arith.constant 0 : i32
    %c0_i32_1 = arith.constant 0 : i32
    return %c0_i32, %c0_i32_0 : i32, i32
  }
  func.func @transform_6(%arg0: i32) -> (i32, i32) {
    %c0_i32 = arith.constant 0 : i32
    %c0_i32_0 = arith.constant 0 : i32
    %c0_i32_1 = arith.constant 0 : i32
    return %c0_i32, %c0_i32_0 : i32, i32
  }
  func.func @transform_7(%arg0: i32) -> (i32, i32) {
    %c0_i32 = arith.constant 0 : i32
    %c0_i32_0 = arith.constant 0 : i32
    return %c0_i32, %arg0 : i32, i32
  }
}

</mosaic_0001>

<llo_original>
// kernel: cnn_series_forward.1
$region0: #{cnn_series_forward.1}
  #allocation0 [shape = 'u32[]', space=smem, size = 0x4, offset = 0x4, fixed_abs, tag = 'smem constant byte address 0x4 - core index']
  #allocation1 [shape = 'u32[72,128]{1,0:T(1,128)}', space=vmem, size = 0x9000, scoped, tag = 'internal scratch']
  #allocation2 [shape = 'f32[1,1]{1,0:T(1,128)S(1)}', space=vmem, size = 0x200, scoped, tag = 'scoped memory for cnn_series_forward.1']
  %s0 = inlined_call_operand.vmem [shape: f32[14,128], index: 0, kind: input, shape index: {}]
  %s1 = inlined_call_operand.vmem [shape: f32[3,64,1], index: 1, kind: input, shape index: {}]
  %s2 = inlined_call_operand.vmem [shape: f32[64,1], index: 2, kind: input, shape index: {}]
  %s3 = inlined_call_operand.vmem [shape: bf16[128,384], index: 3, kind: input, shape index: {}]
  %s4 = inlined_call_operand.vmem [shape: f32[32,1], index: 4, kind: input, shape index: {}]
  %s5 = inlined_call_operand.vmem [shape: f32[1,64], index: 5, kind: input, shape index: {}]
  %s6 = inlined_call_operand.<no memory space> [shape: f32[1,1], index: 6, kind: input, shape index: {}]
  %s7 = inlined_call_operand.vmem [shape: f32[1,128], index: 7, kind: output, shape index: {}]
  %s8 = sld [smem:[#allocation0]]
  $region38: #{cnn_series_forward.1} parent=0
    _
  %s10 = ssub.s32 1, %s8
  %s11 = scalar_select 0, %s10, %s8
  %v12 = vstv %s6
  %13 = vst [vmem:[#allocation2] sm:$0x1] %v12
  // Predicated region
  $region2: #{cnn_series_forward.1} parent=0 // pred_check
    _
  $region3: #{cnn_series_forward.1} parent=0 // pred_check_branch
    %15 = sbr.rel (0) target = $region5
  $region4: #{cnn_series_forward.1} parent=0 // pred_region
    _
  $region5: #{cnn_series_forward.1} parent=0 // pred_fallthru
    _
  // Predicated region
  $region6: #{cnn_series_forward.1} parent=0 // pred_check
    _
  $region7: #{cnn_series_forward.1} parent=0 // pred_check_branch
    %17 = sbr.rel (0) target = $region9
  $region8: #{cnn_series_forward.1} parent=0 // pred_region
    _
  $region9: #{cnn_series_forward.1} parent=0 // pred_fallthru
    _
  // Predicated region
  $region10: #{cnn_series_forward.1} parent=0 // pred_check
    _
  $region11: #{cnn_series_forward.1} parent=0 // pred_check_branch
    %19 = sbr.rel (0) target = $region13
  $region12: #{cnn_series_forward.1} parent=0 // pred_region
    _
  $region13: #{cnn_series_forward.1} parent=0 // pred_fallthru
    _
  // Predicated region
  $region14: #{cnn_series_forward.1} parent=0 // pred_check
    _
  $region15: #{cnn_series_forward.1} parent=0 // pred_check_branch
    %21 = sbr.rel (0) target = $region17
  $region16: #{cnn_series_forward.1} parent=0 // pred_region
    _
  $region17: #{cnn_series_forward.1} parent=0 // pred_fallthru
    _
  // Predicated region
  $region18: #{cnn_series_forward.1} parent=0 // pred_check
    _
  $region19: #{cnn_series_forward.1} parent=0 // pred_check_branch
    %23 = sbr.rel (0) target = $region21
  $region20: #{cnn_series_forward.1} parent=0 // pred_region
    _
  $region21: #{cnn_series_forward.1} parent=0 // pred_fallthru
    _
  // Predicated region
  $region22: #{cnn_series_forward.1} parent=0 // pred_check
    _
  $region23: #{cnn_series_forward.1} parent=0 // pred_check_branch
    %25 = sbr.rel (0) target = $region25
  $region24: #{cnn_series_forward.1} parent=0 // pred_region
    _
  $region25: #{cnn_series_forward.1} parent=0 // pred_fallthru
    _
  // Predicated region
  $region26: #{cnn_series_forward.1} parent=0 // pred_check
    _
  $region27: #{cnn_series_forward.1} parent=0 // pred_check_branch
    %27 = sbr.rel (0) target = $region29
  $region28: #{cnn_series_forward.1} parent=0 // pred_region
    _
  $region29: #{cnn_series_forward.1} parent=0 // pred_fallthru
    _
  %v28 = vld [vmem:[%s0] sm:$0xff]
  %v29 = vld [vmem:[%s0 + $0x8] sm:$0x3f]
  %v30 = vld [vmem:[%s1] sm:$0xff]
  %v31 = vld [vmem:[%s1 + $0x8] sm:$0xff]
  %v32 = vld [vmem:[%s1 + $0x10] sm:$0xff]
  %v33 = vld [vmem:[%s1 + $0x18] sm:$0xff]
  %v34 = vld [vmem:[%s1 + $0x20] sm:$0xff]
  %v35 = vld [vmem:[%s1 + $0x28] sm:$0xff]
  %v36 = vld [vmem:[%s1 + $0x30] sm:$0xff]
  %v37 = vld [vmem:[%s1 + $0x38] sm:$0xff]
  %v38 = vld [vmem:[%s1 + $0x40] sm:$0xff]
  %v39 = vld [vmem:[%s1 + $0x48] sm:$0xff]
  %v40 = vld [vmem:[%s1 + $0x50] sm:$0xff]
  %v41 = vld [vmem:[%s1 + $0x58] sm:$0xff]
  %v42 = vld [vmem:[%s1 + $0x60] sm:$0xff]
  %v43 = vld [vmem:[%s1 + $0x68] sm:$0xff]
  %v44 = vld [vmem:[%s1 + $0x70] sm:$0xff]
  %v45 = vld [vmem:[%s1 + $0x78] sm:$0xff]
  %v46 = vld [vmem:[%s1 + $0x80] sm:$0xff]
  %v47 = vld [vmem:[%s1 + $0x88] sm:$0xff]
  %v48 = vld [vmem:[%s1 + $0x90] sm:$0xff]
  %v49 = vld [vmem:[%s1 + $0x98] sm:$0xff]
  %v50 = vld [vmem:[%s1 + $0xa0] sm:$0xff]
  %v51 = vld [vmem:[%s1 + $0xa8] sm:$0xff]
  %v52 = vld [vmem:[%s1 + $0xb0] sm:$0xff]
  %v53 = vld [vmem:[%s1 + $0xb8] sm:$0xff]
  %v54 = vld [vmem:[%s2] sm:$0xff]
  %v55 = vld [vmem:[%s2 + $0x8] sm:$0xff]
  %v56 = vld [vmem:[%s2 + $0x10] sm:$0xff]
  %v57 = vld [vmem:[%s2 + $0x18] sm:$0xff]
  %v58 = vld [vmem:[%s2 + $0x20] sm:$0xff]
  %v59 = vld [vmem:[%s2 + $0x28] sm:$0xff]
  %v60 = vld [vmem:[%s2 + $0x30] sm:$0xff]
  %v61 = vld [vmem:[%s2 + $0x38] sm:$0xff]
  %v64 = vrot.slane %v28, 1
  %v65 = vrot.slane %v28, 2
  %v66 = vrot.slane %v28, 3
  %v67 = vrot.slane %v28, 4
  %v68 = vrot.slane %v28, 5
  %v69 = vrot.slane %v28, 6
  %v70 = vrot.slane %v28, 7
  %v71 = vrot.slane %v29, 1
  %v72 = vrot.slane %v29, 2
  %v73 = vrot.slane %v29, 3
  %v74 = vperm.slane %v28, 0
  %v75 = vperm.slane %v64, 0
  %v76 = vperm.slane %v65, 0
  %v77 = vperm.slane %v66, 0
  %v78 = vperm.slane %v67, 0
  %v79 = vperm.slane %v68, 0
  %v80 = vperm.slane %v69, 0
  %v81 = vperm.slane %v70, 0
  %v82 = vperm.slane %v29, 0
  %v83 = vperm.slane %v71, 0
  %v84 = vperm.slane %v72, 0
  %v85 = vperm.slane %v73, 0
  %99 = vset.pattern.permute.xlu0 0
  %100 = vperm.xlu0 %99, %v30
  %v101 = vpop.permute.xlu0 %100
  %104 = vset.pattern.permute.xlu0 0
  %105 = vperm.xlu0 %104, %v31
  %v106 = vpop.permute.xlu0 %105
  %109 = vset.pattern.permute.xlu0 0
  %110 = vperm.xlu0 %109, %v32
  %v111 = vpop.permute.xlu0 %110
  %114 = vset.pattern.permute.xlu0 0
  %115 = vperm.xlu0 %114, %v33
  %v116 = vpop.permute.xlu0 %115
  %119 = vset.pattern.permute.xlu0 0
  %120 = vperm.xlu0 %119, %v34
  %v121 = vpop.permute.xlu0 %120
  %124 = vset.pattern.permute.xlu0 0
  %125 = vperm.xlu0 %124, %v35
  %v126 = vpop.permute.xlu0 %125
  %129 = vset.pattern.permute.xlu0 0
  %130 = vperm.xlu0 %129, %v36
  %v131 = vpop.permute.xlu0 %130
  %134 = vset.pattern.permute.xlu0 0
  %135 = vperm.xlu0 %134, %v37
  %v136 = vpop.permute.xlu0 %135
  %v138 = vmul.f32 %v74, %v101
  %v139 = vmul.f32 %v74, %v106
  %v140 = vmul.f32 %v74, %v111
  %v141 = vmul.f32 %v74, %v116
  %v142 = vmul.f32 %v74, %v121
  %v143 = vmul.f32 %v74, %v126
  %v144 = vmul.f32 %v74, %v131
  %v145 = vmul.f32 %v74, %v136
  %v146 = vmul.f32 %v75, %v101
  %v147 = vmul.f32 %v75, %v106
  %v148 = vmul.f32 %v75, %v111
  %v149 = vmul.f32 %v75, %v116
  %v150 = vmul.f32 %v75, %v121
  %v151 = vmul.f32 %v75, %v126
  %v152 = vmul.f32 %v75, %v131
  %v153 = vmul.f32 %v75, %v136
  %v154 = vmul.f32 %v76, %v101
  %v155 = vmul.f32 %v76, %v106
  %v156 = vmul.f32 %v76, %v111
  %v157 = vmul.f32 %v76, %v116
  %v158 = vmul.f32 %v76, %v121
  %v159 = vmul.f32 %v76, %v126
  %v160 = vmul.f32 %v76, %v131
  %v161 = vmul.f32 %v76, %v136
  %v162 = vmul.f32 %v77, %v101
  %v163 = vmul.f32 %v77, %v106
  %v164 = vmul.f32 %v77, %v111
  %v165 = vmul.f32 %v77, %v116
  %v166 = vmul.f32 %v77, %v121
  %v167 = vmul.f32 %v77, %v126
  %v168 = vmul.f32 %v77, %v131
  %v169 = vmul.f32 %v77, %v136
  %v170 = vmul.f32 %v78, %v101
  %v171 = vmul.f32 %v78, %v106
  %v172 = vmul.f32 %v78, %v111
  %v173 = vmul.f32 %v78, %v116
  %v174 = vmul.f32 %v78, %v121
  %v175 = vmul.f32 %v78, %v126
  %v176 = vmul.f32 %v78, %v131
  %v177 = vmul.f32 %v78, %v136
  %v178 = vmul.f32 %v79, %v101
  %v179 = vmul.f32 %v79, %v106
  %v180 = vmul.f32 %v79, %v111
  %v181 = vmul.f32 %v79, %v116
  %v182 = vmul.f32 %v79, %v121
  %v183 = vmul.f32 %v79, %v126
  %v184 = vmul.f32 %v79, %v131
  %v185 = vmul.f32 %v79, %v136
  %v186 = vmul.f32 %v80, %v101
  %v187 = vmul.f32 %v80, %v106
  %v188 = vmul.f32 %v80, %v111
  %v189 = vmul.f32 %v80, %v116
  %v190 = vmul.f32 %v80, %v121
  %v191 = vmul.f32 %v80, %v126
  %v192 = vmul.f32 %v80, %v131
  %v193 = vmul.f32 %v80, %v136
  %v194 = vmul.f32 %v81, %v101
  %v195 = vmul.f32 %v81, %v106
  %v196 = vmul.f32 %v81, %v111
  %v197 = vmul.f32 %v81, %v116
  %v198 = vmul.f32 %v81, %v121
  %v199 = vmul.f32 %v81, %v126
  %v200 = vmul.f32 %v81, %v131
  %v201 = vmul.f32 %v81, %v136
  %v202 = vmul.f32 %v82, %v101
  %v203 = vmul.f32 %v82, %v106
  %v204 = vmul.f32 %v82, %v111
  %v205 = vmul.f32 %v82, %v116
  %v206 = vmul.f32 %v82, %v121
  %v207 = vmul.f32 %v82, %v126
  %v208 = vmul.f32 %v82, %v131
  %v209 = vmul.f32 %v82, %v136
  %v210 = vmul.f32 %v83, %v101
  %v211 = vmul.f32 %v83, %v106
  %v212 = vmul.f32 %v83, %v111
  %v213 = vmul.f32 %v83, %v116
  %v214 = vmul.f32 %v83, %v121
  %v215 = vmul.f32 %v83, %v126
  %v216 = vmul.f32 %v83, %v131
  %v217 = vmul.f32 %v83, %v136
  %v218 = vmul.f32 %v84, %v101
  %v219 = vmul.f32 %v84, %v106
  %v220 = vmul.f32 %v84, %v111
  %v221 = vmul.f32 %v84, %v116
  %v222 = vmul.f32 %v84, %v121
  %v223 = vmul.f32 %v84, %v126
  %v224 = vmul.f32 %v84, %v131
  %v225 = vmul.f32 %v84, %v136
  %v226 = vmul.f32 %v85, %v101
  %v227 = vmul.f32 %v85, %v106
  %v228 = vmul.f32 %v85, %v111
  %v229 = vmul.f32 %v85, %v116
  %v230 = vmul.f32 %v85, %v121
  %v231 = vmul.f32 %v85, %v126
  %v232 = vmul.f32 %v85, %v131
  %v233 = vmul.f32 %v85, %v136
  %235 = vset.pattern.permute.xlu0 0
  %236 = vperm.xlu0 %235, %v54
  %v237 = vpop.permute.xlu0 %236
  %240 = vset.pattern.permute.xlu0 0
  %241 = vperm.xlu0 %240, %v55
  %v242 = vpop.permute.xlu0 %241
  %245 = vset.pattern.permute.xlu0 0
  %246 = vperm.xlu0 %245, %v56
  %v247 = vpop.permute.xlu0 %246
  %250 = vset.pattern.permute.xlu0 0
  %251 = vperm.xlu0 %250, %v57
  %v252 = vpop.permute.xlu0 %251
  %255 = vset.pattern.permute.xlu0 0
  %256 = vperm.xlu0 %255, %v58
  %v257 = vpop.permute.xlu0 %256
  %260 = vset.pattern.permute.xlu0 0
  %261 = vperm.xlu0 %260, %v59
  %v262 = vpop.permute.xlu0 %261
  %265 = vset.pattern.permute.xlu0 0
  %266 = vperm.xlu0 %265, %v60
  %v267 = vpop.permute.xlu0 %266
  %270 = vset.pattern.permute.xlu0 0
  %271 = vperm.xlu0 %270, %v61
  %v272 = vpop.permute.xlu0 %271
  %v274 = vadd.f32 %v237, %v138
  %v275 = vadd.f32 %v242, %v139
  %v276 = vadd.f32 %v247, %v140
  %v277 = vadd.f32 %v252, %v141
  %v278 = vadd.f32 %v257, %v142
  %v279 = vadd.f32 %v262, %v143
  %v280 = vadd.f32 %v267, %v144
  %v281 = vadd.f32 %v272, %v145
  %v282 = vadd.f32 %v237, %v146
  %v283 = vadd.f32 %v242, %v147
  %v284 = vadd.f32 %v247, %v148
  %v285 = vadd.f32 %v252, %v149
  %v286 = vadd.f32 %v257, %v150
  %v287 = vadd.f32 %v262, %v151
  %v288 = vadd.f32 %v267, %v152
  %v289 = vadd.f32 %v272, %v153
  %v290 = vadd.f32 %v237, %v154
  %v291 = vadd.f32 %v242, %v155
  %v292 = vadd.f32 %v247, %v156
  %v293 = vadd.f32 %v252, %v157
  %v294 = vadd.f32 %v257, %v158
  %v295 = vadd.f32 %v262, %v159
  %v296 = vadd.f32 %v267, %v160
  %v297 = vadd.f32 %v272, %v161
  %v298 = vadd.f32 %v237, %v162
  %v299 = vadd.f32 %v242, %v163
  %v300 = vadd.f32 %v247, %v164
  %v301 = vadd.f32 %v252, %v165
  %v302 = vadd.f32 %v257, %v166
  %v303 = vadd.f32 %v262, %v167
  %v304 = vadd.f32 %v267, %v168
  %v305 = vadd.f32 %v272, %v169
  %v306 = vadd.f32 %v237, %v170
  %v307 = vadd.f32 %v242, %v171
  %v308 = vadd.f32 %v247, %v172
  %v309 = vadd.f32 %v252, %v173
  %v310 = vadd.f32 %v257, %v174
  %v311 = vadd.f32 %v262, %v175
  %v312 = vadd.f32 %v267, %v176
  %v313 = vadd.f32 %v272, %v177
  %v314 = vadd.f32 %v237, %v178
  %v315 = vadd.f32 %v242, %v179
  %v316 = vadd.f32 %v247, %v180
  %v317 = vadd.f32 %v252, %v181
  %v318 = vadd.f32 %v257, %v182
  %v319 = vadd.f32 %v262, %v183
  %v320 = vadd.f32 %v267, %v184
  %v321 = vadd.f32 %v272, %v185
  %v322 = vadd.f32 %v237, %v186
  %v323 = vadd.f32 %v242, %v187
  %v324 = vadd.f32 %v247, %v188
  %v325 = vadd.f32 %v252, %v189
  %v326 = vadd.f32 %v257, %v190
  %v327 = vadd.f32 %v262, %v191
  %v328 = vadd.f32 %v267, %v192
  %v329 = vadd.f32 %v272, %v193
  %v330 = vadd.f32 %v237, %v194
  %v331 = vadd.f32 %v242, %v195
  %v332 = vadd.f32 %v247, %v196
  %v333 = vadd.f32 %v252, %v197
  %v334 = vadd.f32 %v257, %v198
  %v335 = vadd.f32 %v262, %v199
  %v336 = vadd.f32 %v267, %v200
  %v337 = vadd.f32 %v272, %v201
  %v338 = vadd.f32 %v237, %v202
  %v339 = vadd.f32 %v242, %v203
  %v340 = vadd.f32 %v247, %v204
  %v341 = vadd.f32 %v252, %v205
  %v342 = vadd.f32 %v257, %v206
  %v343 = vadd.f32 %v262, %v207
  %v344 = vadd.f32 %v267, %v208
  %v345 = vadd.f32 %v272, %v209
  %v346 = vadd.f32 %v237, %v210
  %v347 = vadd.f32 %v242, %v211
  %v348 = vadd.f32 %v247, %v212
  %v349 = vadd.f32 %v252, %v213
  %v350 = vadd.f32 %v257, %v214
  %v351 = vadd.f32 %v262, %v215
  %v352 = vadd.f32 %v267, %v216
  %v353 = vadd.f32 %v272, %v217
  %v354 = vadd.f32 %v237, %v218
  %v355 = vadd.f32 %v242, %v219
  %v356 = vadd.f32 %v247, %v220
  %v357 = vadd.f32 %v252, %v221
  %v358 = vadd.f32 %v257, %v222
  %v359 = vadd.f32 %v262, %v223
  %v360 = vadd.f32 %v267, %v224
  %v361 = vadd.f32 %v272, %v225
  %v362 = vadd.f32 %v237, %v226
  %v363 = vadd.f32 %v242, %v227
  %v364 = vadd.f32 %v247, %v228
  %v365 = vadd.f32 %v252, %v229
  %v366 = vadd.f32 %v257, %v230
  %v367 = vadd.f32 %v262, %v231
  %v368 = vadd.f32 %v267, %v232
  %v369 = vadd.f32 %v272, %v233
  %370 = vst [vmem:[#allocation1] sm:$0xff] %v28
  %s371 = scalar_lea.vmem [#allocation1], 1
  %v372 = vld [vmem:[%s371] ss:$9 sm:$0xff]
  %s373 = scalar_lea.vmem [#allocation1], 2
  %v374 = vld [vmem:[%s373] ss:$9 sm:$0xff]
  %s375 = scalar_lea.vmem [#allocation1], 3
  %v376 = vld [vmem:[%s375] ss:$9 sm:$0xff]
  %s377 = scalar_lea.vmem [#allocation1], 4
  %v378 = vld [vmem:[%s377] ss:$9 sm:$0xff]
  %s379 = scalar_lea.vmem [#allocation1], 5
  %v380 = vld [vmem:[%s379] ss:$9 sm:$0xff]
  %s381 = scalar_lea.vmem [#allocation1], 6
  %v382 = vld [vmem:[%s381] ss:$9 sm:$0xff]
  %s383 = scalar_lea.vmem [#allocation1], 7
  %v384 = vld [vmem:[%s383] ss:$9 sm:$0xff]
  %385 = vst [vmem:[#allocation1] sm:$0xff] %v29
  %v386 = vld [vmem:[#allocation1] ss:$9 sm:$0xff]
  %v387 = vld [vmem:[%s371] ss:$9 sm:$0xff]
  %v388 = vld [vmem:[%s373] ss:$9 sm:$0xff]
  %v389 = vld [vmem:[%s375] ss:$9 sm:$0xff]
  %v390 = vld [vmem:[%s377] ss:$9 sm:$0xff]
  %v391 = vperm.slane %v372, 0
  %v392 = vperm.slane %v374, 0
  %v393 = vperm.slane %v376, 0
  %v394 = vperm.slane %v378, 0
  %v395 = vperm.slane %v380, 0
  %v396 = vperm.slane %v382, 0
  %v397 = vperm.slane %v384, 0
  %v398 = vperm.slane %v386, 0
  %v399 = vperm.slane %v387, 0
  %v400 = vperm.slane %v388, 0
  %v401 = vperm.slane %v389, 0
  %v402 = vperm.slane %v390, 0
  %416 = vset.pattern.permute.xlu0 0
  %417 = vperm.xlu0 %416, %v38
  %v418 = vpop.permute.xlu0 %417
  %421 = vset.pattern.permute.xlu0 0
  %422 = vperm.xlu0 %421, %v39
  %v423 = vpop.permute.xlu0 %422
  %426 = vset.pattern.permute.xlu0 0
  %427 = vperm.xlu0 %426, %v40
  %v428 = vpop.permute.xlu0 %427
  %431 = vset.pattern.permute.xlu0 0
  %432 = vperm.xlu0 %431, %v41
  %v433 = vpop.permute.xlu0 %432
  %436 = vset.pattern.permute.xlu0 0
  %437 = vperm.xlu0 %436, %v42
  %v438 = vpop.permute.xlu0 %437
  %441 = vset.pattern.permute.xlu0 0
  %442 = vperm.xlu0 %441, %v43
  %v443 = vpop.permute.xlu0 %442
  %446 = vset.pattern.permute.xlu0 0
  %447 = vperm.xlu0 %446, %v44
  %v448 = vpop.permute.xlu0 %447
  %451 = vset.pattern.permute.xlu0 0
  %452 = vperm.xlu0 %451, %v45
  %v453 = vpop.permute.xlu0 %452
  %v455 = vmul.f32 %v391, %v418
  %v456 = vmul.f32 %v391, %v423
  %v457 = vmul.f32 %v391, %v428
  %v458 = vmul.f32 %v391, %v433
  %v459 = vmul.f32 %v391, %v438
  %v460 = vmul.f32 %v391, %v443
  %v461 = vmul.f32 %v391, %v448
  %v462 = vmul.f32 %v391, %v453
  %v463 = vmul.f32 %v392, %v418
  %v464 = vmul.f32 %v392, %v423
  %v465 = vmul.f32 %v392, %v428
  %v466 = vmul.f32 %v392, %v433
  %v467 = vmul.f32 %v392, %v438
  %v468 = vmul.f32 %v392, %v443
  %v469 = vmul.f32 %v392, %v448
  %v470 = vmul.f32 %v392, %v453
  %v471 = vmul.f32 %v393, %v418
  %v472 = vmul.f32 %v393, %v423
  %v473 = vmul.f32 %v393, %v428
  %v474 = vmul.f32 %v393, %v433
  %v475 = vmul.f32 %v393, %v438
  %v476 = vmul.f32 %v393, %v443
  %v477 = vmul.f32 %v393, %v448
  %v478 = vmul.f32 %v393, %v453
  %v479 = vmul.f32 %v394, %v418
  %v480 = vmul.f32 %v394, %v423
  %v481 = vmul.f32 %v394, %v428
  %v482 = vmul.f32 %v394, %v433
  %v483 = vmul.f32 %v394, %v438
  %v484 = vmul.f32 %v394, %v443
  %v485 = vmul.f32 %v394, %v448
  %v486 = vmul.f32 %v394, %v453
  %v487 = vmul.f32 %v395, %v418
  %v488 = vmul.f32 %v395, %v423
  %v489 = vmul.f32 %v395, %v428
  %v490 = vmul.f32 %v395, %v433
  %v491 = vmul.f32 %v395, %v438
  %v492 = vmul.f32 %v395, %v443
  %v493 = vmul.f32 %v395, %v448
  %v494 = vmul.f32 %v395, %v453
  %v495 = vmul.f32 %v396, %v418
  %v496 = vmul.f32 %v396, %v423
  %v497 = vmul.f32 %v396, %v428
  %v498 = vmul.f32 %v396, %v433
  %v499 = vmul.f32 %v396, %v438
  %v500 = vmul.f32 %v396, %v443
  %v501 = vmul.f32 %v396, %v448
  %v502 = vmul.f32 %v396, %v453
  %v503 = vmul.f32 %v397, %v418
  %v504 = vmul.f32 %v397, %v423
  %v505 = vmul.f32 %v397, %v428
  %v506 = vmul.f32 %v397, %v433
  %v507 = vmul.f32 %v397, %v438
  %v508 = vmul.f32 %v397, %v443
  %v509 = vmul.f32 %v397, %v448
  %v510 = vmul.f32 %v397, %v453
  %v511 = vmul.f32 %v398, %v418
  %v512 = vmul.f32 %v398, %v423
  %v513 = vmul.f32 %v398, %v428
  %v514 = vmul.f32 %v398, %v433
  %v515 = vmul.f32 %v398, %v438
  %v516 = vmul.f32 %v398, %v443
  %v517 = vmul.f32 %v398, %v448
  %v518 = vmul.f32 %v398, %v453
  %v519 = vmul.f32 %v399, %v418
  %v520 = vmul.f32 %v399, %v423
  %v521 = vmul.f32 %v399, %v428
  %v522 = vmul.f32 %v399, %v433
  %v523 = vmul.f32 %v399, %v438
  %v524 = vmul.f32 %v399, %v443
  %v525 = vmul.f32 %v399, %v448
  %v526 = vmul.f32 %v399, %v453
  %v527 = vmul.f32 %v400, %v418
  %v528 = vmul.f32 %v400, %v423
  %v529 = vmul.f32 %v400, %v428
  %v530 = vmul.f32 %v400, %v433
  %v531 = vmul.f32 %v400, %v438
  %v532 = vmul.f32 %v400, %v443
  %v533 = vmul.f32 %v400, %v448
  %v534 = vmul.f32 %v400, %v453
  %v535 = vmul.f32 %v401, %v418
  %v536 = vmul.f32 %v401, %v423
  %v537 = vmul.f32 %v401, %v428
  %v538 = vmul.f32 %v401, %v433
  %v539 = vmul.f32 %v401, %v438
  %v540 = vmul.f32 %v401, %v443
  %v541 = vmul.f32 %v401, %v448
  %v542 = vmul.f32 %v401, %v453
  %v543 = vmul.f32 %v402, %v418
  %v544 = vmul.f32 %v402, %v423
  %v545 = vmul.f32 %v402, %v428
  %v546 = vmul.f32 %v402, %v433
  %v547 = vmul.f32 %v402, %v438
  %v548 = vmul.f32 %v402, %v443
  %v549 = vmul.f32 %v402, %v448
  %v550 = vmul.f32 %v402, %v453
  %v551 = vadd.f32 %v274, %v455
  %v552 = vadd.f32 %v275, %v456
  %v553 = vadd.f32 %v276, %v457
  %v554 = vadd.f32 %v277, %v458
  %v555 = vadd.f32 %v278, %v459
  %v556 = vadd.f32 %v279, %v460
  %v557 = vadd.f32 %v280, %v461
  %v558 = vadd.f32 %v281, %v462
  %v559 = vadd.f32 %v282, %v463
  %v560 = vadd.f32 %v283, %v464
  %v561 = vadd.f32 %v284, %v465
  %v562 = vadd.f32 %v285, %v466
  %v563 = vadd.f32 %v286, %v467
  %v564 = vadd.f32 %v287, %v468
  %v565 = vadd.f32 %v288, %v469
  %v566 = vadd.f32 %v289, %v470
  %v567 = vadd.f32 %v290, %v471
  %v568 = vadd.f32 %v291, %v472
  %v569 = vadd.f32 %v292, %v473
  %v570 = vadd.f32 %v293, %v474
  %v571 = vadd.f32 %v294, %v475
  %v572 = vadd.f32 %v295, %v476
  %v573 = vadd.f32 %v296, %v477
  %v574 = vadd.f32 %v297, %v478
  %v575 = vadd.f32 %v298, %v479
  %v576 = vadd.f32 %v299, %v480
  %v577 = vadd.f32 %v300, %v481
  %v578 = vadd.f32 %v301, %v482
  %v579 = vadd.f32 %v302, %v483
  %v580 = vadd.f32 %v303, %v484
  %v581 = vadd.f32 %v304, %v485
  %v582 = vadd.f32 %v305, %v486
  %v583 = vadd.f32 %v306, %v487
  %v584 = vadd.f32 %v307, %v488
  %v585 = vadd.f32 %v308, %v489
  %v586 = vadd.f32 %v309, %v490
  %v587 = vadd.f32 %v310, %v491
  %v588 = vadd.f32 %v311, %v492
  %v589 = vadd.f32 %v312, %v493
  %v590 = vadd.f32 %v313, %v494
  %v591 = vadd.f32 %v314, %v495
  %v592 = vadd.f32 %v315, %v496
  %v593 = vadd.f32 %v316, %v497
  %v594 = vadd.f32 %v317, %v498
  %v595 = vadd.f32 %v318, %v499
  %v596 = vadd.f32 %v319, %v500
  %v597 = vadd.f32 %v320, %v501
  %v598 = vadd.f32 %v321, %v502
  %v599 = vadd.f32 %v322, %v503
  %v600 = vadd.f32 %v323, %v504
  %v601 = vadd.f32 %v324, %v505
  %v602 = vadd.f32 %v325, %v506
  %v603 = vadd.f32 %v326, %v507
  %v604 = vadd.f32 %v327, %v508
  %v605 = vadd.f32 %v328, %v509
  %v606 = vadd.f32 %v329, %v510
  %v607 = vadd.f32 %v330, %v511
  %v608 = vadd.f32 %v331, %v512
  %v609 = vadd.f32 %v332, %v513
  %v610 = vadd.f32 %v333, %v514
  %v611 = vadd.f32 %v334, %v515
  %v612 = vadd.f32 %v335, %v516
  %v613 = vadd.f32 %v336, %v517
  %v614 = vadd.f32 %v337, %v518
  %v615 = vadd.f32 %v338, %v519
  %v616 = vadd.f32 %v339, %v520
  %v617 = vadd.f32 %v340, %v521
  %v618 = vadd.f32 %v341, %v522
  %v619 = vadd.f32 %v342, %v523
  %v620 = vadd.f32 %v343, %v524
  %v621 = vadd.f32 %v344, %v525
  %v622 = vadd.f32 %v345, %v526
  %v623 = vadd.f32 %v346, %v527
  %v624 = vadd.f32 %v347, %v528
  %v625 = vadd.f32 %v348, %v529
  %v626 = vadd.f32 %v349, %v530
  %v627 = vadd.f32 %v350, %v531
  %v628 = vadd.f32 %v351, %v532
  %v629 = vadd.f32 %v352, %v533
  %v630 = vadd.f32 %v353, %v534
  %v631 = vadd.f32 %v354, %v535
  %v632 = vadd.f32 %v355, %v536
  %v633 = vadd.f32 %v356, %v537
  %v634 = vadd.f32 %v357, %v538
  %v635 = vadd.f32 %v358, %v539
  %v636 = vadd.f32 %v359, %v540
  %v637 = vadd.f32 %v360, %v541
  %v638 = vadd.f32 %v361, %v542
  %v639 = vadd.f32 %v362, %v543
  %v640 = vadd.f32 %v363, %v544
  %v641 = vadd.f32 %v364, %v545
  %v642 = vadd.f32 %v365, %v546
  %v643 = vadd.f32 %v366, %v547
  %v644 = vadd.f32 %v367, %v548
  %v645 = vadd.f32 %v368, %v549
  %v646 = vadd.f32 %v369, %v550
  %647 = vst [vmem:[#allocation1] sm:$0xff] %v28
  %s648 = scalar_lea.vmem [#allocation1], 2
  %v649 = vld [vmem:[%s648] ss:$9 sm:$0xff]
  %s650 = scalar_lea.vmem [#allocation1], 3
  %v651 = vld [vmem:[%s650] ss:$9 sm:$0xff]
  %s652 = scalar_lea.vmem [#allocation1], 4
  %v653 = vld [vmem:[%s652] ss:$9 sm:$0xff]
  %s654 = scalar_lea.vmem [#allocation1], 5
  %v655 = vld [vmem:[%s654] ss:$9 sm:$0xff]
  %s656 = scalar_lea.vmem [#allocation1], 6
  %v657 = vld [vmem:[%s656] ss:$9 sm:$0xff]
  %s658 = scalar_lea.vmem [#allocation1], 7
  %v659 = vld [vmem:[%s658] ss:$9 sm:$0xff]
  %660 = vst [vmem:[#allocation1] sm:$0xff] %v29
  %v661 = vld [vmem:[#allocation1] ss:$9 sm:$0xff]
  %s662 = scalar_lea.vmem [#allocation1], 1
  %v663 = vld [vmem:[%s662] ss:$9 sm:$0xff]
  %v664 = vld [vmem:[%s648] ss:$9 sm:$0xff]
  %v665 = vld [vmem:[%s650] ss:$9 sm:$0xff]
  %v666 = vld [vmem:[%s652] ss:$9 sm:$0xff]
  %v667 = vld [vmem:[%s654] ss:$9 sm:$0xff]
  %v668 = vperm.slane %v649, 0
  %v669 = vperm.slane %v651, 0
  %v670 = vperm.slane %v653, 0
  %v671 = vperm.slane %v655, 0
  %v672 = vperm.slane %v657, 0
  %v673 = vperm.slane %v659, 0
  %v674 = vperm.slane %v661, 0
  %v675 = vperm.slane %v663, 0
  %v676 = vperm.slane %v664, 0
  %v677 = vperm.slane %v665, 0
  %v678 = vperm.slane %v666, 0
  %v679 = vperm.slane %v667, 0
  %693 = vset.pattern.permute.xlu0 0
  %694 = vperm.xlu0 %693, %v46
  %v695 = vpop.permute.xlu0 %694
  %698 = vset.pattern.permute.xlu0 0
  %699 = vperm.xlu0 %698, %v47
  %v700 = vpop.permute.xlu0 %699
  %703 = vset.pattern.permute.xlu0 0
  %704 = vperm.xlu0 %703, %v48
  %v705 = vpop.permute.xlu0 %704
  %708 = vset.pattern.permute.xlu0 0
  %709 = vperm.xlu0 %708, %v49
  %v710 = vpop.permute.xlu0 %709
  %713 = vset.pattern.permute.xlu0 0
  %714 = vperm.xlu0 %713, %v50
  %v715 = vpop.permute.xlu0 %714
  %718 = vset.pattern.permute.xlu0 0
  %719 = vperm.xlu0 %718, %v51
  %v720 = vpop.permute.xlu0 %719
  %723 = vset.pattern.permute.xlu0 0
  %724 = vperm.xlu0 %723, %v52
  %v725 = vpop.permute.xlu0 %724
  %728 = vset.pattern.permute.xlu0 0
  %729 = vperm.xlu0 %728, %v53
  %v730 = vpop.permute.xlu0 %729
  %v732 = vmul.f32 %v668, %v695
  %v733 = vmul.f32 %v668, %v700
  %v734 = vmul.f32 %v668, %v705
  %v735 = vmul.f32 %v668, %v710
  %v736 = vmul.f32 %v668, %v715
  %v737 = vmul.f32 %v668, %v720
  %v738 = vmul.f32 %v668, %v725
  %v739 = vmul.f32 %v668, %v730
  %v740 = vmul.f32 %v669, %v695
  %v741 = vmul.f32 %v669, %v700
  %v742 = vmul.f32 %v669, %v705
  %v743 = vmul.f32 %v669, %v710
  %v744 = vmul.f32 %v669, %v715
  %v745 = vmul.f32 %v669, %v720
  %v746 = vmul.f32 %v669, %v725
  %v747 = vmul.f32 %v669, %v730
  %v748 = vmul.f32 %v670, %v695
  %v749 = vmul.f32 %v670, %v700
  %v750 = vmul.f32 %v670, %v705
  %v751 = vmul.f32 %v670, %v710
  %v752 = vmul.f32 %v670, %v715
  %v753 = vmul.f32 %v670, %v720
  %v754 = vmul.f32 %v670, %v725
  %v755 = vmul.f32 %v670, %v730
  %v756 = vmul.f32 %v671, %v695
  %v757 = vmul.f32 %v671, %v700
  %v758 = vmul.f32 %v671, %v705
  %v759 = vmul.f32 %v671, %v710
  %v760 = vmul.f32 %v671, %v715
  %v761 = vmul.f32 %v671, %v720
  %v762 = vmul.f32 %v671, %v725
  %v763 = vmul.f32 %v671, %v730
  %v764 = vmul.f32 %v672, %v695
  %v765 = vmul.f32 %v672, %v700
  %v766 = vmul.f32 %v672, %v705
  %v767 = vmul.f32 %v672, %v710
  %v768 = vmul.f32 %v672, %v715
  %v769 = vmul.f32 %v672, %v720
  %v770 = vmul.f32 %v672, %v725
  %v771 = vmul.f32 %v672, %v730
  %v772 = vmul.f32 %v673, %v695
  %v773 = vmul.f32 %v673, %v700
  %v774 = vmul.f32 %v673, %v705
  %v775 = vmul.f32 %v673, %v710
  %v776 = vmul.f32 %v673, %v715
  %v777 = vmul.f32 %v673, %v720
  %v778 = vmul.f32 %v673, %v725
  %v779 = vmul.f32 %v673, %v730
  %v780 = vmul.f32 %v674, %v695
  %v781 = vmul.f32 %v674, %v700
  %v782 = vmul.f32 %v674, %v705
  %v783 = vmul.f32 %v674, %v710
  %v784 = vmul.f32 %v674, %v715
  %v785 = vmul.f32 %v674, %v720
  %v786 = vmul.f32 %v674, %v725
  %v787 = vmul.f32 %v674, %v730
  %v788 = vmul.f32 %v675, %v695
  %v789 = vmul.f32 %v675, %v700
  %v790 = vmul.f32 %v675, %v705
  %v791 = vmul.f32 %v675, %v710
  %v792 = vmul.f32 %v675, %v715
  %v793 = vmul.f32 %v675, %v720
  %v794 = vmul.f32 %v675, %v725
  %v795 = vmul.f32 %v675, %v730
  %v796 = vmul.f32 %v676, %v695
  %v797 = vmul.f32 %v676, %v700
  %v798 = vmul.f32 %v676, %v705
  %v799 = vmul.f32 %v676, %v710
  %v800 = vmul.f32 %v676, %v715
  %v801 = vmul.f32 %v676, %v720
  %v802 = vmul.f32 %v676, %v725
  %v803 = vmul.f32 %v676, %v730
  %v804 = vmul.f32 %v677, %v695
  %v805 = vmul.f32 %v677, %v700
  %v806 = vmul.f32 %v677, %v705
  %v807 = vmul.f32 %v677, %v710
  %v808 = vmul.f32 %v677, %v715
  %v809 = vmul.f32 %v677, %v720
  %v810 = vmul.f32 %v677, %v725
  %v811 = vmul.f32 %v677, %v730
  %v812 = vmul.f32 %v678, %v695
  %v813 = vmul.f32 %v678, %v700
  %v814 = vmul.f32 %v678, %v705
  %v815 = vmul.f32 %v678, %v710
  %v816 = vmul.f32 %v678, %v715
  %v817 = vmul.f32 %v678, %v720
  %v818 = vmul.f32 %v678, %v725
  %v819 = vmul.f32 %v678, %v730
  %v820 = vmul.f32 %v679, %v695
  %v821 = vmul.f32 %v679, %v700
  %v822 = vmul.f32 %v679, %v705
  %v823 = vmul.f32 %v679, %v710
  %v824 = vmul.f32 %v679, %v715
  %v825 = vmul.f32 %v679, %v720
  %v826 = vmul.f32 %v679, %v725
  %v827 = vmul.f32 %v679, %v730
  %v828 = vadd.f32 %v551, %v732
  %v829 = vadd.f32 %v552, %v733
  %v830 = vadd.f32 %v553, %v734
  %v831 = vadd.f32 %v554, %v735
  %v832 = vadd.f32 %v555, %v736
  %v833 = vadd.f32 %v556, %v737
  %v834 = vadd.f32 %v557, %v738
  %v835 = vadd.f32 %v558, %v739
  %v836 = vadd.f32 %v559, %v740
  %v837 = vadd.f32 %v560, %v741
  %v838 = vadd.f32 %v561, %v742
  %v839 = vadd.f32 %v562, %v743
  %v840 = vadd.f32 %v563, %v744
  %v841 = vadd.f32 %v564, %v745
  %v842 = vadd.f32 %v565, %v746
  %v843 = vadd.f32 %v566, %v747
  %v844 = vadd.f32 %v567, %v748
  %v845 = vadd.f32 %v568, %v749
  %v846 = vadd.f32 %v569, %v750
  %v847 = vadd.f32 %v570, %v751
  %v848 = vadd.f32 %v571, %v752
  %v849 = vadd.f32 %v572, %v753
  %v850 = vadd.f32 %v573, %v754
  %v851 = vadd.f32 %v574, %v755
  %v852 = vadd.f32 %v575, %v756
  %v853 = vadd.f32 %v576, %v757
  %v854 = vadd.f32 %v577, %v758
  %v855 = vadd.f32 %v578, %v759
  %v856 = vadd.f32 %v579, %v760
  %v857 = vadd.f32 %v580, %v761
  %v858 = vadd.f32 %v581, %v762
  %v859 = vadd.f32 %v582, %v763
  %v860 = vadd.f32 %v583, %v764
  %v861 = vadd.f32 %v584, %v765
  %v862 = vadd.f32 %v585, %v766
  %v863 = vadd.f32 %v586, %v767
  %v864 = vadd.f32 %v587, %v768
  %v865 = vadd.f32 %v588, %v769
  %v866 = vadd.f32 %v589, %v770
  %v867 = vadd.f32 %v590, %v771
  %v868 = vadd.f32 %v591, %v772
  %v869 = vadd.f32 %v592, %v773
  %v870 = vadd.f32 %v593, %v774
  %v871 = vadd.f32 %v594, %v775
  %v872 = vadd.f32 %v595, %v776
  %v873 = vadd.f32 %v596, %v777
  %v874 = vadd.f32 %v597, %v778
  %v875 = vadd.f32 %v598, %v779
  %v876 = vadd.f32 %v599, %v780
  %v877 = vadd.f32 %v600, %v781
  %v878 = vadd.f32 %v601, %v782
  %v879 = vadd.f32 %v602, %v783
  %v880 = vadd.f32 %v603, %v784
  %v881 = vadd.f32 %v604, %v785
  %v882 = vadd.f32 %v605, %v786
  %v883 = vadd.f32 %v606, %v787
  %v884 = vadd.f32 %v607, %v788
  %v885 = vadd.f32 %v608, %v789
  %v886 = vadd.f32 %v609, %v790
  %v887 = vadd.f32 %v610, %v791
  %v888 = vadd.f32 %v611, %v792
  %v889 = vadd.f32 %v612, %v793
  %v890 = vadd.f32 %v613, %v794
  %v891 = vadd.f32 %v614, %v795
  %v892 = vadd.f32 %v615, %v796
  %v893 = vadd.f32 %v616, %v797
  %v894 = vadd.f32 %v617, %v798
  %v895 = vadd.f32 %v618, %v799
  %v896 = vadd.f32 %v619, %v800
  %v897 = vadd.f32 %v620, %v801
  %v898 = vadd.f32 %v621, %v802
  %v899 = vadd.f32 %v622, %v803
  %v900 = vadd.f32 %v623, %v804
  %v901 = vadd.f32 %v624, %v805
  %v902 = vadd.f32 %v625, %v806
  %v903 = vadd.f32 %v626, %v807
  %v904 = vadd.f32 %v627, %v808
  %v905 = vadd.f32 %v628, %v809
  %v906 = vadd.f32 %v629, %v810
  %v907 = vadd.f32 %v630, %v811
  %v908 = vadd.f32 %v631, %v812
  %v909 = vadd.f32 %v632, %v813
  %v910 = vadd.f32 %v633, %v814
  %v911 = vadd.f32 %v634, %v815
  %v912 = vadd.f32 %v635, %v816
  %v913 = vadd.f32 %v636, %v817
  %v914 = vadd.f32 %v637, %v818
  %v915 = vadd.f32 %v638, %v819
  %v916 = vadd.f32 %v639, %v820
  %v917 = vadd.f32 %v640, %v821
  %v918 = vadd.f32 %v641, %v822
  %v919 = vadd.f32 %v642, %v823
  %v920 = vadd.f32 %v643, %v824
  %v921 = vadd.f32 %v644, %v825
  %v922 = vadd.f32 %v645, %v826
  %v923 = vadd.f32 %v646, %v827
  %v924 = vmax.f32 %v828, %v836
  %v925 = vmax.f32 %v829, %v837
  %v926 = vmax.f32 %v830, %v838
  %v927 = vmax.f32 %v831, %v839
  %v928 = vmax.f32 %v832, %v840
  %v929 = vmax.f32 %v833, %v841
  %v930 = vmax.f32 %v834, %v842
  %v931 = vmax.f32 %v835, %v843
  %v932 = vmax.f32 %v844, %v852
  %v933 = vmax.f32 %v845, %v853
  %v934 = vmax.f32 %v846, %v854
  %v935 = vmax.f32 %v847, %v855
  %v936 = vmax.f32 %v848, %v856
  %v937 = vmax.f32 %v849, %v857
  %v938 = vmax.f32 %v850, %v858
  %v939 = vmax.f32 %v851, %v859
  %v940 = vmax.f32 %v860, %v868
  %v941 = vmax.f32 %v861, %v869
  %v942 = vmax.f32 %v862, %v870
  %v943 = vmax.f32 %v863, %v871
  %v944 = vmax.f32 %v864, %v872
  %v945 = vmax.f32 %v865, %v873
  %v946 = vmax.f32 %v866, %v874
  %v947 = vmax.f32 %v867, %v875
  %v948 = vmax.f32 %v876, %v884
  %v949 = vmax.f32 %v877, %v885
  %v950 = vmax.f32 %v878, %v886
  %v951 = vmax.f32 %v879, %v887
  %v952 = vmax.f32 %v880, %v888
  %v953 = vmax.f32 %v881, %v889
  %v954 = vmax.f32 %v882, %v890
  %v955 = vmax.f32 %v883, %v891
  %v956 = vmax.f32 %v892, %v900
  %v957 = vmax.f32 %v893, %v901
  %v958 = vmax.f32 %v894, %v902
  %v959 = vmax.f32 %v895, %v903
  %v960 = vmax.f32 %v896, %v904
  %v961 = vmax.f32 %v897, %v905
  %v962 = vmax.f32 %v898, %v906
  %v963 = vmax.f32 %v899, %v907
  %v964 = vmax.f32 %v908, %v916
  %v965 = vmax.f32 %v909, %v917
  %v966 = vmax.f32 %v910, %v918
  %v967 = vmax.f32 %v911, %v919
  %v968 = vmax.f32 %v912, %v920
  %v969 = vmax.f32 %v913, %v921
  %v970 = vmax.f32 %v914, %v922
  %v971 = vmax.f32 %v915, %v923
  %v972 = vmax.f32 %v924, 0.0
  %v973 = vmax.f32 %v925, 0.0
  %v974 = vmax.f32 %v926, 0.0
  %v975 = vmax.f32 %v927, 0.0
  %v976 = vmax.f32 %v928, 0.0
  %v977 = vmax.f32 %v929, 0.0
  %v978 = vmax.f32 %v930, 0.0
  %v979 = vmax.f32 %v931, 0.0
  %v980 = vmax.f32 %v932, 0.0
  %v981 = vmax.f32 %v933, 0.0
  %v982 = vmax.f32 %v934, 0.0
  %v983 = vmax.f32 %v935, 0.0
  %v984 = vmax.f32 %v936, 0.0
  %v985 = vmax.f32 %v937, 0.0
  %v986 = vmax.f32 %v938, 0.0
  %v987 = vmax.f32 %v939, 0.0
  %v988 = vmax.f32 %v940, 0.0
  %v989 = vmax.f32 %v941, 0.0
  %v990 = vmax.f32 %v942, 0.0
  %v991 = vmax.f32 %v943, 0.0
  %v992 = vmax.f32 %v944, 0.0
  %v993 = vmax.f32 %v945, 0.0
  %v994 = vmax.f32 %v946, 0.0
  %v995 = vmax.f32 %v947, 0.0
  %v996 = vmax.f32 %v948, 0.0
  %v997 = vmax.f32 %v949, 0.0
  %v998 = vmax.f32 %v950, 0.0
  %v999 = vmax.f32 %v951, 0.0
  %v1000 = vmax.f32 %v952, 0.0
  %v1001 = vmax.f32 %v953, 0.0
  %v1002 = vmax.f32 %v954, 0.0
  %v1003 = vmax.f32 %v955, 0.0
  %v1004 = vmax.f32 %v956, 0.0
  %v1005 = vmax.f32 %v957, 0.0
  %v1006 = vmax.f32 %v958, 0.0
  %v1007 = vmax.f32 %v959, 0.0
  %v1008 = vmax.f32 %v960, 0.0
  %v1009 = vmax.f32 %v961, 0.0
  %v1010 = vmax.f32 %v962, 0.0
  %v1011 = vmax.f32 %v963, 0.0
  %v1012 = vmax.f32 %v964, 0.0
  %v1013 = vmax.f32 %v965, 0.0
  %v1014 = vmax.f32 %v966, 0.0
  %v1015 = vmax.f32 %v967, 0.0
  %v1016 = vmax.f32 %v968, 0.0
  %v1017 = vmax.f32 %v969, 0.0
  %v1018 = vmax.f32 %v970, 0.0
  %v1019 = vmax.f32 %v971, 0.0
  %v1020 = vld [vmem:[%s3] sm:$0xff]
  %v1021 = vld [vmem:[%s3 + $0x8] sm:$0xf]
  %v1022 = vld [vmem:[%s3 + $0xc] sm:$0xff]
  %v1023 = vld [vmem:[%s3 + $0x14] sm:$0xf]
  %v1024 = vld [vmem:[%s3 + $0x18] sm:$0xff]
  %v1025 = vld [vmem:[%s3 + $0x20] sm:$0xf]
  %v1026 = vld [vmem:[%s3 + $0x24] sm:$0xff]
  %v1027 = vld [vmem:[%s3 + $0x2c] sm:$0xf]
  %v1028 = vld [vmem:[%s3 + $0x30] sm:$0xff]
  %v1029 = vld [vmem:[%s3 + $0x38] sm:$0xf]
  %v1030 = vld [vmem:[%s3 + $0x3c] sm:$0xff]
  %v1031 = vld [vmem:[%s3 + $0x44] sm:$0xf]
  %v1032 = vld [vmem:[%s3 + $0x48] sm:$0xff]
  %v1033 = vld [vmem:[%s3 + $0x50] sm:$0xf]
  %v1034 = vld [vmem:[%s3 + $0x54] sm:$0xff]
  %v1035 = vld [vmem:[%s3 + $0x5c] sm:$0xf]
  %v1036 = vld [vmem:[%s3 + $0x60] sm:$0xff]
  %v1037 = vld [vmem:[%s3 + $0x68] sm:$0xf]
  %v1038 = vld [vmem:[%s3 + $0x6c] sm:$0xff]
  %v1039 = vld [vmem:[%s3 + $0x74] sm:$0xf]
  %v1040 = vld [vmem:[%s3 + $0x78] sm:$0xff]
  %v1041 = vld [vmem:[%s3 + $0x80] sm:$0xf]
  %v1042 = vld [vmem:[%s3 + $0x84] sm:$0xff]
  %v1043 = vld [vmem:[%s3 + $0x8c] sm:$0xf]
  %v1044 = vld [vmem:[%s3 + $0x90] sm:$0xff]
  %v1045 = vld [vmem:[%s3 + $0x98] sm:$0xf]
  %v1046 = vld [vmem:[%s3 + $0x9c] sm:$0xff]
  %v1047 = vld [vmem:[%s3 + $0xa4] sm:$0xf]
  %v1048 = vld [vmem:[%s3 + $0xa8] sm:$0xff]
  %v1049 = vld [vmem:[%s3 + $0xb0] sm:$0xf]
  %v1050 = vld [vmem:[%s3 + $0xb4] sm:$0xff]
  %v1051 = vld [vmem:[%s3 + $0xbc] sm:$0xf]
  %v1052 = vpack.c.bf16 %v973, %v972
  %v1053 = vpack.c.bf16 %v975, %v974
  %v1054 = vpack.c.bf16 %v977, %v976
  %v1055 = vpack.c.bf16 %v979, %v978
  %v1056 = vpack.c.bf16 %v981, %v980
  %v1057 = vpack.c.bf16 %v983, %v982
  %v1058 = vpack.c.bf16 %v985, %v984
  %v1059 = vpack.c.bf16 %v987, %v986
  %v1060 = vpack.c.bf16 %v989, %v988
  %v1061 = vpack.c.bf16 %v991, %v990
  %v1062 = vpack.c.bf16 %v993, %v992
  %v1063 = vpack.c.bf16 %v995, %v994
  %v1064 = vpack.c.bf16 %v997, %v996
  %v1065 = vpack.c.bf16 %v999, %v998
  %v1066 = vpack.c.bf16 %v1001, %v1000
  %v1067 = vpack.c.bf16 %v1003, %v1002
  %v1068 = vpack.c.bf16 %v1005, %v1004
  %v1069 = vpack.c.bf16 %v1007, %v1006
  %v1070 = vpack.c.bf16 %v1009, %v1008
  %v1071 = vpack.c.bf16 %v1011, %v1010
  %v1072 = vpack.c.bf16 %v1013, %v1012
  %v1073 = vpack.c.bf16 %v1015, %v1014
  %v1074 = vpack.c.bf16 %v1017, %v1016
  %v1075 = vpack.c.bf16 %v1019, %v1018
  %v1108 = vunpack.c.l.b16 %v1020
  %v1109 = vunpack.c.h.b16 %v1020
  %v1110 = vunpack.c.l.b16 %v1021
  %v1111 = vunpack.c.l.b16 %v1022
  %v1112 = vunpack.c.h.b16 %v1022
  %v1113 = vunpack.c.l.b16 %v1023
  %v1114 = vunpack.c.l.b16 %v1024
  %v1115 = vunpack.c.h.b16 %v1024
  %v1116 = vunpack.c.l.b16 %v1025
  %v1117 = vunpack.c.l.b16 %v1026
  %v1118 = vunpack.c.h.b16 %v1026
  %v1119 = vunpack.c.l.b16 %v1027
  %v1120 = vunpack.c.l.b16 %v1028
  %v1121 = vunpack.c.h.b16 %v1028
  %v1122 = vunpack.c.l.b16 %v1029
  %v1123 = vunpack.c.l.b16 %v1030
  %v1124 = vunpack.c.h.b16 %v1030
  %v1125 = vunpack.c.l.b16 %v1031
  %v1126 = vunpack.c.l.b16 %v1032
  %v1127 = vunpack.c.h.b16 %v1032
  %v1128 = vunpack.c.l.b16 %v1033
  %v1129 = vunpack.c.l.b16 %v1034
  %v1130 = vunpack.c.h.b16 %v1034
  %v1131 = vunpack.c.l.b16 %v1035
  %v1132 = vunpack.c.l.b16 %v1036
  %v1133 = vunpack.c.h.b16 %v1036
  %v1134 = vunpack.c.l.b16 %v1037
  %v1135 = vunpack.c.l.b16 %v1038
  %v1136 = vunpack.c.h.b16 %v1038
  %v1137 = vunpack.c.l.b16 %v1039
  %v1138 = vunpack.c.l.b16 %v1040
  %v1139 = vunpack.c.h.b16 %v1040
  %v1140 = vunpack.c.l.b16 %v1041
  %v1141 = vunpack.c.l.b16 %v1042
  %v1142 = vunpack.c.h.b16 %v1042
  %v1143 = vunpack.c.l.b16 %v1043
  %v1144 = vunpack.c.l.b16 %v1044
  %v1145 = vunpack.c.h.b16 %v1044
  %v1146 = vunpack.c.l.b16 %v1045
  %v1147 = vunpack.c.l.b16 %v1046
  %v1148 = vunpack.c.h.b16 %v1046
  %v1149 = vunpack.c.l.b16 %v1047
  %v1150 = vunpack.c.l.b16 %v1048
  %v1151 = vunpack.c.h.b16 %v1048
  %v1152 = vunpack.c.l.b16 %v1049
  %v1153 = vunpack.c.l.b16 %v1050
  %v1154 = vunpack.c.h.b16 %v1050
  %v1155 = vunpack.c.l.b16 %v1051
  %v1156 = vpack.c.b16 %v1111, %v1108
  %v1157 = vpack.c.b16 %v1112, %v1109
  %v1158 = vpack.c.b16 %v1113, %v1110
  %v1159 = vpack.c.b16 %v1117, %v1114
  %v1160 = vpack.c.b16 %v1118, %v1115
  %v1161 = vpack.c.b16 %v1119, %v1116
  %v1162 = vpack.c.b16 %v1123, %v1120
  %v1163 = vpack.c.b16 %v1124, %v1121
  %v1164 = vpack.c.b16 %v1125, %v1122
  %v1165 = vpack.c.b16 %v1129, %v1126
  %v1166 = vpack.c.b16 %v1130, %v1127
  %v1167 = vpack.c.b16 %v1131, %v1128
  %v1168 = vpack.c.b16 %v1135, %v1132
  %v1169 = vpack.c.b16 %v1136, %v1133
  %v1170 = vpack.c.b16 %v1137, %v1134
  %v1171 = vpack.c.b16 %v1141, %v1138
  %v1172 = vpack.c.b16 %v1142, %v1139
  %v1173 = vpack.c.b16 %v1143, %v1140
  %v1174 = vpack.c.b16 %v1147, %v1144
  %v1175 = vpack.c.b16 %v1148, %v1145
  %v1176 = vpack.c.b16 %v1149, %v1146
  %v1177 = vpack.c.b16 %v1153, %v1150
  %v1178 = vpack.c.b16 %v1154, %v1151
  %v1179 = vpack.c.b16 %v1155, %v1152
  %1204 = vmatpush.bf16.msra.mxu0 %v1059
  %1205 = vmatpush.bf16.msra.mxu0 %v1058
  %1206 = vmatpush.bf16.msra.mxu0 %v1057
  %1207 = vmatpush.bf16.msra.mxu0 %v1056
  %1208 = vmatpush.bf16.msra.mxu0 %v1055
  %1209 = vmatpush.bf16.msra.mxu0 %v1054
  %1210 = vmatpush.bf16.msra.mxu0 %v1053
  %1211 = vmatpush.bf16.msra.mxu0 %v1052
  %1212 = vmatmul.bf16.gmra.mxu0 %v1156
  %v1213 = vpop.f32.mrf.mxu0
  %v1214 = vadd.f32 0.0, %v1213
  %v1215 = vpop.f32.mrf.mxu0
  %v1216 = vadd.f32 0.0, %v1215
  %1217 = vmatmul.bf16.gmra.mxu0 %v1159
  %v1218 = vpop.f32.mrf.mxu0
  %v1219 = vadd.f32 0.0, %v1218
  %v1220 = vpop.f32.mrf.mxu0
  %v1221 = vadd.f32 0.0, %v1220
  %1222 = vmatmul.bf16.gmra.mxu0 %v1162
  %v1223 = vpop.f32.mrf.mxu0
  %v1224 = vadd.f32 0.0, %v1223
  %v1225 = vpop.f32.mrf.mxu0
  %v1226 = vadd.f32 0.0, %v1225
  %1227 = vmatmul.bf16.gmra.mxu0 %v1165
  %v1228 = vpop.f32.mrf.mxu0
  %v1229 = vadd.f32 0.0, %v1228
  %v1230 = vpop.f32.mrf.mxu0
  %v1231 = vadd.f32 0.0, %v1230
  %1232 = vmatmul.bf16.gmra.mxu0 %v1168
  %v1233 = vpop.f32.mrf.mxu0
  %v1234 = vadd.f32 0.0, %v1233
  %v1235 = vpop.f32.mrf.mxu0
  %v1236 = vadd.f32 0.0, %v1235
  %1237 = vmatmul.bf16.gmra.mxu0 %v1171
  %v1238 = vpop.f32.mrf.mxu0
  %v1239 = vadd.f32 0.0, %v1238
  %v1240 = vpop.f32.mrf.mxu0
  %v1241 = vadd.f32 0.0, %v1240
  %1242 = vmatmul.bf16.gmra.mxu0 %v1174
  %v1243 = vpop.f32.mrf.mxu0
  %v1244 = vadd.f32 0.0, %v1243
  %v1245 = vpop.f32.mrf.mxu0
  %v1246 = vadd.f32 0.0, %v1245
  %1247 = vmatmul.bf16.gmra.mxu0 %v1177
  %v1248 = vpop.f32.mrf.mxu0
  %v1249 = vadd.f32 0.0, %v1248
  %v1250 = vpop.f32.mrf.mxu0
  %v1251 = vadd.f32 0.0, %v1250
  %1252 = vdwg.mxu0
  %1253 = vmatpush.bf16.msra.mxu0 %v1067
  %1254 = vmatpush.bf16.msra.mxu0 %v1066
  %1255 = vmatpush.bf16.msra.mxu0 %v1065
  %1256 = vmatpush.bf16.msra.mxu0 %v1064
  %1257 = vmatpush.bf16.msra.mxu0 %v1063
  %1258 = vmatpush.bf16.msra.mxu0 %v1062
  %1259 = vmatpush.bf16.msra.mxu0 %v1061
  %1260 = vmatpush.bf16.msra.mxu0 %v1060
  %1261 = vmatmul.bf16.gmra.mxu0 %v1157
  %v1262 = vpop.f32.mrf.mxu0
  %v1263 = vadd.f32 %v1214, %v1262
  %v1264 = vpop.f32.mrf.mxu0
  %v1265 = vadd.f32 %v1216, %v1264
  %1266 = vmatmul.bf16.gmra.mxu0 %v1160
  %v1267 = vpop.f32.mrf.mxu0
  %v1268 = vadd.f32 %v1219, %v1267
  %v1269 = vpop.f32.mrf.mxu0
  %v1270 = vadd.f32 %v1221, %v1269
  %1271 = vmatmul.bf16.gmra.mxu0 %v1163
  %v1272 = vpop.f32.mrf.mxu0
  %v1273 = vadd.f32 %v1224, %v1272
  %v1274 = vpop.f32.mrf.mxu0
  %v1275 = vadd.f32 %v1226, %v1274
  %1276 = vmatmul.bf16.gmra.mxu0 %v1166
  %v1277 = vpop.f32.mrf.mxu0
  %v1278 = vadd.f32 %v1229, %v1277
  %v1279 = vpop.f32.mrf.mxu0
  %v1280 = vadd.f32 %v1231, %v1279
  %1281 = vmatmul.bf16.gmra.mxu0 %v1169
  %v1282 = vpop.f32.mrf.mxu0
  %v1283 = vadd.f32 %v1234, %v1282
  %v1284 = vpop.f32.mrf.mxu0
  %v1285 = vadd.f32 %v1236, %v1284
  %1286 = vmatmul.bf16.gmra.mxu0 %v1172
  %v1287 = vpop.f32.mrf.mxu0
  %v1288 = vadd.f32 %v1239, %v1287
  %v1289 = vpop.f32.mrf.mxu0
  %v1290 = vadd.f32 %v1241, %v1289
  %1291 = vmatmul.bf16.gmra.mxu0 %v1175
  %v1292 = vpop.f32.mrf.mxu0
  %v1293 = vadd.f32 %v1244, %v1292
  %v1294 = vpop.f32.mrf.mxu0
  %v1295 = vadd.f32 %v1246, %v1294
  %1296 = vmatmul.bf16.gmra.mxu0 %v1178
  %v1297 = vpop.f32.mrf.mxu0
  %v1298 = vadd.f32 %v1249, %v1297
  %v1299 = vpop.f32.mrf.mxu0
  %v1300 = vadd.f32 %v1251, %v1299
  %1301 = vdwg.mxu0
  %1302 = vmatpush.bf16.msra.mxu0 %v1075
  %1303 = vmatpush.bf16.msra.mxu0 %v1074
  %1304 = vmatpush.bf16.msra.mxu0 %v1073
  %1305 = vmatpush.bf16.msra.mxu0 %v1072
  %1306 = vmatpush.bf16.msra.mxu0 %v1071
  %1307 = vmatpush.bf16.msra.mxu0 %v1070
  %1308 = vmatpush.bf16.msra.mxu0 %v1069
  %1309 = vmatpush.bf16.msra.mxu0 %v1068
  %1310 = vmatmul.bf16.gmra.mxu0 %v1158
  %v1311 = vpop.f32.mrf.mxu0
  %v1312 = vadd.f32 %v1263, %v1311
  %v1313 = vpop.f32.mrf.mxu0
  %v1314 = vadd.f32 %v1265, %v1313
  %1315 = vmatmul.bf16.gmra.mxu0 %v1161
  %v1316 = vpop.f32.mrf.mxu0
  %v1317 = vadd.f32 %v1268, %v1316
  %v1318 = vpop.f32.mrf.mxu0
  %v1319 = vadd.f32 %v1270, %v1318
  %1320 = vmatmul.bf16.gmra.mxu0 %v1164
  %v1321 = vpop.f32.mrf.mxu0
  %v1322 = vadd.f32 %v1273, %v1321
  %v1323 = vpop.f32.mrf.mxu0
  %v1324 = vadd.f32 %v1275, %v1323
  %1325 = vmatmul.bf16.gmra.mxu0 %v1167
  %v1326 = vpop.f32.mrf.mxu0
  %v1327 = vadd.f32 %v1278, %v1326
  %v1328 = vpop.f32.mrf.mxu0
  %v1329 = vadd.f32 %v1280, %v1328
  %1330 = vmatmul.bf16.gmra.mxu0 %v1170
  %v1331 = vpop.f32.mrf.mxu0
  %v1332 = vadd.f32 %v1283, %v1331
  %v1333 = vpop.f32.mrf.mxu0
  %v1334 = vadd.f32 %v1285, %v1333
  %1335 = vmatmul.bf16.gmra.mxu0 %v1173
  %v1336 = vpop.f32.mrf.mxu0
  %v1337 = vadd.f32 %v1288, %v1336
  %v1338 = vpop.f32.mrf.mxu0
  %v1339 = vadd.f32 %v1290, %v1338
  %1340 = vmatmul.bf16.gmra.mxu0 %v1176
  %v1341 = vpop.f32.mrf.mxu0
  %v1342 = vadd.f32 %v1293, %v1341
  %v1343 = vpop.f32.mrf.mxu0
  %v1344 = vadd.f32 %v1295, %v1343
  %1345 = vmatmul.bf16.gmra.mxu0 %v1179
  %v1346 = vpop.f32.mrf.mxu0
  %v1347 = vadd.f32 %v1298, %v1346
  %v1348 = vpop.f32.mrf.mxu0
  %v1349 = vadd.f32 %v1300, %v1348
  %1350 = vdwg.mxu0
  %v1351 = vld [vmem:[%s4] sm:$0xff]
  %v1352 = vld [vmem:[%s4 + $0x8] sm:$0xff]
  %v1353 = vld [vmem:[%s4 + $0x10] sm:$0xff]
  %v1354 = vld [vmem:[%s4 + $0x18] sm:$0xff]
  %1356 = vset.pattern.permute.xlu0 0
  %1357 = vperm.xlu0 %1356, %v1351
  %v1358 = vpop.permute.xlu0 %1357
  %1361 = vset.pattern.permute.xlu0 0
  %1362 = vperm.xlu0 %1361, %v1352
  %v1363 = vpop.permute.xlu0 %1362
  %1366 = vset.pattern.permute.xlu0 0
  %1367 = vperm.xlu0 %1366, %v1353
  %v1368 = vpop.permute.xlu0 %1367
  %1371 = vset.pattern.permute.xlu0 0
  %1372 = vperm.xlu0 %1371, %v1354
  %v1373 = vpop.permute.xlu0 %1372
  %v1375 = vadd.f32 %v1312, %v1358
  %v1376 = vadd.f32 %v1314, %v1363
  %v1377 = vadd.f32 %v1317, %v1368
  %v1378 = vadd.f32 %v1319, %v1373
  %v1379 = vadd.f32 %v1322, %v1358
  %v1380 = vadd.f32 %v1324, %v1363
  %v1381 = vadd.f32 %v1327, %v1368
  %v1382 = vadd.f32 %v1329, %v1373
  %v1383 = vadd.f32 %v1332, %v1358
  %v1384 = vadd.f32 %v1334, %v1363
  %v1385 = vadd.f32 %v1337, %v1368
  %v1386 = vadd.f32 %v1339, %v1373
  %v1387 = vadd.f32 %v1342, %v1358
  %v1388 = vadd.f32 %v1344, %v1363
  %v1389 = vadd.f32 %v1347, %v1368
  %v1390 = vadd.f32 %v1349, %v1373
  %v1391 = vmax.f32 %v1375, %v1379
  %v1392 = vmax.f32 %v1376, %v1380
  %v1393 = vmax.f32 %v1377, %v1381
  %v1394 = vmax.f32 %v1378, %v1382
  %v1395 = vmax.f32 %v1383, %v1387
  %v1396 = vmax.f32 %v1384, %v1388
  %v1397 = vmax.f32 %v1385, %v1389
  %v1398 = vmax.f32 %v1386, %v1390
  %v1399 = vmax.f32 %v1391, 0.0
  %v1400 = vmax.f32 %v1392, 0.0
  %v1401 = vmax.f32 %v1393, 0.0
  %v1402 = vmax.f32 %v1394, 0.0
  %v1403 = vmax.f32 %v1395, 0.0
  %v1404 = vmax.f32 %v1396, 0.0
  %v1405 = vmax.f32 %v1397, 0.0
  %v1406 = vmax.f32 %v1398, 0.0
  %v1407 = vld [vmem:[%s5] sm:$0x1]
  %v1408 = vld [vmem:[#allocation2] sm:$0x1]
  %1410 = vset.pattern.permute.xlu0 0
  %1411 = vperm.xlu0 %1410, %v1408
  %v1412 = vpop.permute.xlu0 %1411
  %v1414 = vperm.slane %v1412, 0
  %vm1415 = vcmask 523264
  %v1417 = vsel %vm1415, %v1407, 0
  %1419 = vmatpush.msra.mxu0 0.0
  %1420 = vmatpush.msra.mxu0 0.0
  %1421 = vmatpush.msra.mxu0 0.0
  %1422 = vmatpush.msra.mxu0 0.0
  %1423 = vmatpush.msra.mxu0 0.0
  %1424 = vmatpush.msra.mxu0 0.0
  %1425 = vmatpush.msra.mxu0 0.0
  %1426 = vmatpush.msra.mxu0 0.0
  %1427 = vmatpush.msra.mxu0 %v1406
  %1428 = vmatpush.msra.mxu0 %v1405
  %1429 = vmatpush.msra.mxu0 %v1404
  %1430 = vmatpush.msra.mxu0 %v1403
  %1431 = vmatpush.msra.mxu0 %v1402
  %1432 = vmatpush.msra.mxu0 %v1401
  %1433 = vmatpush.msra.mxu0 %v1400
  %1434 = vmatpush.msra.mxu0 %v1399
  %1435 = vmatmul.f32.gmra.mxu0 %v1417
  %v1436 = vpop.f32.mrf.mxu0
  %v1437 = vadd.f32 %v1414, %v1436
  %1438 = vdwg.mxu0
  %1439 = vst [vmem:[%s7] sm:$0x1] %v1437
  // Predicated region
  $region30: #{cnn_series_forward.1} parent=0 // pred_check
    _
  $region31: #{cnn_series_forward.1} parent=0 // pred_check_branch
    %1441 = sbr.rel (0) target = $region33
  $region32: #{cnn_series_forward.1} parent=0 // pred_region
    _
  $region33: #{cnn_series_forward.1} parent=0 // pred_fallthru
    _
  // Predicated region
  $region34: #{cnn_series_forward.1} parent=0 // pred_check
    _
  $region35: #{cnn_series_forward.1} parent=0 // pred_check_branch
    %1443 = sbr.rel (0) target = $region37
  $region36: #{cnn_series_forward.1} parent=0 // pred_region
    _
  $region37: #{cnn_series_forward.1} parent=0 // pred_fallthru
    _

</llo_original>
